<compile_context>
chip_gen: v7x
topology: tpu7x:2x2x1
jax: 0.10.0
libtpu: 0.0.40
codegen_flags: <defaults>
</compile_context>

<pallas_src>
import functools

import jax
import jax.numpy as jnp
import numpy as np
from jax.experimental import pallas as pl
from jax.experimental.pallas import tpu as pltpu

IN_CHANNELS = 63     # fixed by the module
CIN_PAD = 64         # 63 -> 64 so input tiles are (sublane, lane) friendly
KSIZE = 3
EPS = 1e-5
LANE = 128
ROW_TARGET = 1024    # target rows (bt * P) per grid step


def _num_tensorcores():
    """Best-effort TensorCore count (1 on v5e/v6e, 2 on v7x)."""
    try:
        info = pltpu.get_tpu_info()
    except Exception:
        return 1
    for name in ("num_cores", "core_count", "num_tensorcores",
                 "tensor_core_count", "cores_per_chip"):
        v = getattr(info, name, None)
        if isinstance(v, int) and 0 < v <= 16:
            return v
    return 1


def _vmem_limit_bytes(rows, cin_p, c1, cp, out_itemsize):
    # double-buffered input + output blocks, hidden scratch, weights, headroom
    blocks = rows * (2 * cin_p * 2 + c1 * 2 + 2 * cp * out_itemsize)
    weights = 2 * KSIZE * (cin_p * c1 + c1 * cp) * 2
    est = 2 * (blocks + weights) + (8 << 20)
    return int(min(max(est, 32 << 20), 56 << 20))


def _encoder_kernel(x_ref, w1_ref, s1_ref, b1_ref, w2_ref, s2_ref, b2_ref,
                    o_ref, hpad_ref, *, L, P):
    # x_ref:   (R, 64)      bf16  flat-padded channels-last input (R = bt*P).
    #                             Rows [b*P : (b+1)*P) hold one batch element:
    #                             [zero row, x[b, 0..L-1], zero rows].
    # w1_ref:  (3, 64, C1)  bf16  conv1 weights, tap-major
    # s1,b1:   (1, C1)      f32   folded BN1 scale / bias (+ conv bias)
    # w2_ref:  (3, C1, CP)  bf16  conv2 weights (CP = feature_dim pad to 128)
    # s2,b2:   (1, CP)      f32
    # o_ref:   (R, CP)            flat-padded output rows
    # hpad_ref:(R, C1)      bf16  scratch: flat-padded hidden activations
    R, cin = x_ref.shape
    c1 = w1_ref.shape[2]
    cp = w2_ref.shape[2]
    rout = R - 2                       # conv output rows computed per step

    xv = x_ref[...]                    # (R, 64) bf16

    # ---- Conv1: one MXU matmul per tap over the flat slab.  Tap slices are
    # pure sublane shifts of the value (no per-batch gaps); f32 accumulation.
    acc = jnp.dot(xv[0:rout], w1_ref[0], preferred_element_type=jnp.float32)
    for k in range(1, KSIZE):
        acc = acc + jnp.dot(xv[k:k + rout], w1_ref[k],
                            preferred_element_type=jnp.float32)
    h = jnp.maximum(acc * s1_ref[...] + b1_ref[...], 0.0)

    # Conv output row n is valid iff (n mod P) < L; every other row straddles
    # a batch boundary or sits in the L padding.  Zero them with a single
    # vectorized select so they double as the padding=1 zeros (and batch
    # separators) for conv2 — no scattered per-batch row writes.
    n = jax.lax.broadcasted_iota(jnp.int32, (rout, 1), 0)
    h = jnp.where((n % P) < L, h, 0.0).astype(jnp.bfloat16)

    # Flat-padded hidden buffer: row m holds conv1 output row m-1.
    hpad_ref[0:1, :] = jnp.zeros((1, c1), jnp.bfloat16)
    hpad_ref[R - 1:R, :] = jnp.zeros((1, c1), jnp.bfloat16)
    hpad_ref[1:1 + rout, :] = h

    # ---- Conv2: same scheme, tap slices read straight off the scratch ref
    # (no full-slab materialization).
    acc2 = jnp.dot(hpad_ref[0:rout, :], w2_ref[0],
                   preferred_element_type=jnp.float32)
    for k in range(1, KSIZE):
        acc2 = acc2 + jnp.dot(hpad_ref[k:k + rout, :], w2_ref[k],
                              preferred_element_type=jnp.float32)
    out = jnp.maximum(acc2 * s2_ref[...] + b2_ref[...], 0.0)

    o_ref[0:rout, :] = out.astype(o_ref.dtype)
    o_ref[rout:R, :] = jnp.zeros((2, cp), o_ref.dtype)


def cnn1d_encoder_channels_last(x_blc, params, feature_dim, *,
                                batch_tile=None, out_dtype=jnp.float32):
    """x_blc: (B, L, 63) channels-last input. Returns (B, L, feature_dim)."""
    w1, s1, b1, w2, s2, b2 = params
    B, L, cin = x_blc.shape
    assert cin == IN_CHANNELS
    cin_p, c1 = w1.shape[1], w1.shape[2]
    cp = w2.shape[2]
    P = ((L + 2 + 15) // 16) * 16      # per-batch padded slot (>= L+2, 16-aligned)

    # bf16 + channel pad 63->64 + embed L into its flat-padded P-row slot.
    # This fuses with whatever layout pass produced x_blc.
    x = x_blc.astype(jnp.bfloat16)
    x = jnp.pad(x, ((0, 0), (1, P - L - 1), (0, cin_p - cin)))    # (B, P, 64)

    # Batch elements per grid step: ~ROW_TARGET rows amortize per-step
    # overhead; only force extra grid steps when there is >1 TensorCore.
    if batch_tile is None:
        bt = max(1, min(B, ROW_TARGET // P))
        ncores = _num_tensorcores()
        if ncores > 1 and B >= ncores:
            bt = min(bt, pl.cdiv(B, ncores))
    else:
        bt = max(1, min(B, batch_tile))
    steps = int(pl.cdiv(B, bt))
    bt = int(pl.cdiv(B, steps))        # balance work across steps / cores
    bp = steps * bt
    if bp != B:
        x = jnp.pad(x, ((0, bp - B), (0, 0), (0, 0)))
    x = x.reshape(bp * P, cin_p)       # flat-padded (rows, channels) slab

    R = bt * P
    kernel = functools.partial(_encoder_kernel, L=L, P=P)
    out_flat = pl.pallas_call(
        kernel,
        out_shape=jax.ShapeDtypeStruct((bp * P, cp), out_dtype),
        grid_spec=pltpu.PrefetchScalarGridSpec(
            num_scalar_prefetch=0,
            grid=(steps,),
            in_specs=[
                pl.BlockSpec((R, cin_p), lambda b: (b, 0)),
                pl.BlockSpec((KSIZE, cin_p, c1), lambda b: (0, 0, 0)),
                pl.BlockSpec((1, c1), lambda b: (0, 0)),
                pl.BlockSpec((1, c1), lambda b: (0, 0)),
                pl.BlockSpec((KSIZE, c1, cp), lambda b: (0, 0, 0)),
                pl.BlockSpec((1, cp), lambda b: (0, 0)),
                pl.BlockSpec((1, cp), lambda b: (0, 0)),
            ],
            out_specs=pl.BlockSpec((R, cp), lambda b: (b, 0)),
            scratch_shapes=[pltpu.VMEM((R, c1), jnp.bfloat16)],
        ),
        compiler_params=pltpu.CompilerParams(
            dimension_semantics=("parallel",),
            vmem_limit_bytes=_vmem_limit_bytes(
                R, cin_p, c1, cp, jnp.dtype(out_dtype).itemsize)),
    )(x, w1, s1, b1, w2, s2, b2)

    # Slice off the L/channel padding and the padded batch elements.
    return out_flat.reshape(bp, P, cp)[:B, :L, :feature_dim]


def cnn1d_encoder(x_ncl, params, feature_dim, **kwargs):
    """PyTorch-layout entry: x_ncl (B, 63, L) -> (B, feature_dim, L)."""
    # TODO(synk): these two transposes are full extra HBM passes; channels-last
    # consumers should call cnn1d_encoder_channels_last directly.
    x_blc = jnp.transpose(x_ncl, (0, 2, 1))
    out = cnn1d_encoder_channels_last(x_blc, params, feature_dim, **kwargs)
    return jnp.transpose(out, (0, 2, 1))


def make_params(key, feature_dim):
    """Deterministic synthetic parameters matching the module's shapes.
    Conv weights are built in torch layout (Cout, Cin, K), repacked to
    (K, Cin, Cout), zero-padded (Cin 63->64, Cout->multiple of 128) and cast
    to bf16 for the MXU. BatchNorm (eval) + conv bias fold into scale/bias."""
    ks = jax.random.split(key, 12)
    c1 = 128
    cp = int(pl.cdiv(feature_dim, LANE)) * LANE

    def conv_params(kw, kb, cin, cout):
        bound = 1.0 / np.sqrt(cin * KSIZE)
        w = jax.random.uniform(kw, (cout, cin, KSIZE), jnp.float32, -bound, bound)
        b = jax.random.uniform(kb, (cout,), jnp.float32, -bound, bound)
        return w, b

    def bn_params(kg, kb, km, kv, c):
        gamma = 1.0 + 0.1 * jax.random.normal(kg, (c,), jnp.float32)
        beta = 0.1 * jax.random.normal(kb, (c,), jnp.float32)
        mean = 0.1 * jax.random.normal(km, (c,), jnp.float32)
        var = jnp.abs(jax.random.normal(kv, (c,), jnp.float32)) + 0.5
        return gamma, beta, mean, var

    w1_t, cb1 = conv_params(ks[0], ks[1], IN_CHANNELS, c1)
    g1, be1, m1, v1 = bn_params(ks[2], ks[3], ks[4], ks[5], c1)
    w2_t, cb2 = conv_params(ks[6], ks[7], c1, feature_dim)
    g2, be2, m2, v2 = bn_params(ks[8], ks[9], ks[10], ks[11], feature_dim)

    def fold(gamma, beta, mean, var, conv_b):
        scale = gamma / jnp.sqrt(var + EPS)
        bias = beta + scale * (conv_b - mean)
        return scale, bias

    s1, b1 = fold(g1, be1, m1, v1, cb1)
    s2, b2 = fold(g2, be2, m2, v2, cb2)

    # (Cout, Cin, K) -> (K, Cin, Cout), zero-pad, cast matmul operands to bf16.
    w1 = jnp.transpose(w1_t, (2, 1, 0))                          # (3, 63, 128)
    w1 = jnp.pad(w1, ((0, 0), (0, CIN_PAD - IN_CHANNELS), (0, 0)))
    w2 = jnp.transpose(w2_t, (2, 1, 0))                          # (3, 128, fd)
    w2 = jnp.pad(w2, ((0, 0), (0, 0), (0, cp - feature_dim)))

    def pad_lane(v, c):
        return jnp.pad(v, (0, c - v.shape[0])).reshape(1, c).astype(jnp.float32)

    kernel_params = (w1.astype(jnp.bfloat16), pad_lane(s1, c1), pad_lane(b1, c1),
                     w2.astype(jnp.bfloat16), pad_lane(s2, cp), pad_lane(b2, cp))
    torch_like = (w1_t, cb1, g1, be1, m1, v1, w2_t, cb2, g2, be2, m2, v2)
    return kernel_params, torch_like


def reference_forward(x_ncl, torch_like):
    """Pure-JAX f32 reference mirroring the PyTorch module (eval-mode BN)."""
    (w1, cb1, g1, be1, m1, v1, w2, cb2, g2, be2, m2, v2) = torch_like

    def conv1d_same(x, w, b):  # x: (B, Cin, L), w: (Cout, Cin, K)
        return jax.lax.conv_general_dilated(
            x, w, window_strides=(1,), padding=((1, 1),),
            dimension_numbers=("NCH", "OIH", "NCH")) + b[None, :, None]

    def bn(x, g, be, m, v):
        return (x - m[None, :, None]) / jnp.sqrt(v[None, :, None] + EPS) \
            * g[None, :, None] + be[None, :, None]

    h = jax.nn.relu(bn(conv1d_same(x_ncl.astype(jnp.float32), w1, cb1), g1, be1, m1, v1))
    o = jax.nn.relu(bn(conv1d_same(h, w2, cb2), g2, be2, m2, v2))
    return o


if __name__ == "__main__":
    key = jax.random.PRNGKey(0)
    configs = [
        (2, 16, 64),   # (B, L, feature_dim) — small, even shapes
        (3, 10, 96),   # odd shapes: exercises L / batch / channel padding
    ]
    for i, (B, L, feature_dim) in enumerate(configs):
        k_x, k_p = jax.random.split(jax.random.fold_in(key, i))
        x = jax.random.normal(k_x, (B, IN_CHANNELS, L), dtype=jnp.float32)
        kernel_params, torch_like = make_params(k_p, feature_dim)

        out = jax.block_until_ready(cnn1d_encoder(x, kernel_params, feature_dim))
        ref = jax.block_until_ready(reference_forward(x, torch_like))

        assert out.shape == (B, feature_dim, L), out.shape
        # bf16 MXU operands with f32 accumulation -> tolerance loosened vs f32.
        np.testing.assert_allclose(np.asarray(out), np.asarray(ref),
                                   rtol=3e-2, atol=3e-2)
    print("KERNEL_OK")
</pallas_src>

<mosaic_0001>
module attributes {stable_mosaic.version = 11 : i64} {
  func.func @_encoder_kernel(%arg0: i32, %arg1: memref<64x64xbf16, #tpu.memory_space<vmem>>, %arg2: memref<3x64x128xbf16, #tpu.memory_space<vmem>>, %arg3: memref<1x128xf32, #tpu.memory_space<vmem>>, %arg4: memref<1x128xf32, #tpu.memory_space<vmem>>, %arg5: memref<3x128x128xbf16, #tpu.memory_space<vmem>>, %arg6: memref<1x128xf32, #tpu.memory_space<vmem>>, %arg7: memref<1x128xf32, #tpu.memory_space<vmem>>, %arg8: memref<64x128xf32, #tpu.memory_space<vmem>>, %arg9: memref<64x128xbf16, #tpu.memory_space<vmem>>) attributes {dimension_semantics = [#tpu.dimension_semantics<parallel>], iteration_bounds = array<i64: 1>, scalar_prefetch = 0 : i64, scratch_operands = 1 : i64, tpu.core_type = #tpu.core_type<tc>, window_params = [{transform_indices = @transform_0, window_bounds = array<i64: 64, 64>}, {pipeline_mode = #tpu.pipeline_mode<synchronous>, transform_indices = @transform_1, window_bounds = array<i64: 3, 64, 128>}, {pipeline_mode = #tpu.pipeline_mode<synchronous>, transform_indices = @transform_2, window_bounds = array<i64: 1, 128>}, {pipeline_mode = #tpu.pipeline_mode<synchronous>, transform_indices = @transform_3, window_bounds = array<i64: 1, 128>}, {pipeline_mode = #tpu.pipeline_mode<synchronous>, transform_indices = @transform_4, window_bounds = array<i64: 3, 128, 128>}, {pipeline_mode = #tpu.pipeline_mode<synchronous>, transform_indices = @transform_5, window_bounds = array<i64: 1, 128>}, {pipeline_mode = #tpu.pipeline_mode<synchronous>, transform_indices = @transform_6, window_bounds = array<i64: 1, 128>}, {transform_indices = @transform_7, window_bounds = array<i64: 64, 128>}]} {
    %c0 = arith.constant 0 : index
    %c0_0 = arith.constant 0 : index
    %0 = vector.load %arg1[%c0, %c0_0] : memref<64x64xbf16, #tpu.memory_space<vmem>>, vector<64x64xbf16>
    %1 = vector.extract_strided_slice %0 {offsets = [0, 0], sizes = [62, 64], strides = [1, 1]} : vector<64x64xbf16> to vector<62x64xbf16>
    %c0_1 = arith.constant 0 : index
    %c0_2 = arith.constant 0 : index
    %c0_3 = arith.constant 0 : index
    %2 = vector.load %arg2[%c0_1, %c0_2, %c0_3] : memref<3x64x128xbf16, #tpu.memory_space<vmem>>, vector<1x64x128xbf16>
    %3 = vector.shape_cast %2 : vector<1x64x128xbf16> to vector<64x128xbf16>
    %cst = arith.constant dense<0.000000e+00> : vector<62x128xf32>
    %4 = tpu.matmul %1, %3, %cst {dimension_numbers = #tpu.dot_dimension_numbers<[1], [0], [0], [1], [0, 0, 1, 1], [], []>} : vector<62x64xbf16>, vector<64x128xbf16>, vector<62x128xf32> -> vector<62x128xf32>
    %5 = vector.extract_strided_slice %0 {offsets = [1, 0], sizes = [62, 64], strides = [1, 1]} : vector<64x64xbf16> to vector<62x64xbf16>
    %c1 = arith.constant 1 : index
    %c0_4 = arith.constant 0 : index
    %c0_5 = arith.constant 0 : index
    %6 = vector.load %arg2[%c1, %c0_4, %c0_5] : memref<3x64x128xbf16, #tpu.memory_space<vmem>>, vector<1x64x128xbf16>
    %7 = vector.shape_cast %6 : vector<1x64x128xbf16> to vector<64x128xbf16>
    %cst_6 = arith.constant dense<0.000000e+00> : vector<62x128xf32>
    %8 = tpu.matmul %5, %7, %cst_6 {dimension_numbers = #tpu.dot_dimension_numbers<[1], [0], [0], [1], [0, 0, 1, 1], [], []>} : vector<62x64xbf16>, vector<64x128xbf16>, vector<62x128xf32> -> vector<62x128xf32>
    %9 = arith.addf %4, %8 : vector<62x128xf32>
    %10 = vector.extract_strided_slice %0 {offsets = [2, 0], sizes = [62, 64], strides = [1, 1]} : vector<64x64xbf16> to vector<62x64xbf16>
    %c2 = arith.constant 2 : index
    %c0_7 = arith.constant 0 : index
    %c0_8 = arith.constant 0 : index
    %11 = vector.load %arg2[%c2, %c0_7, %c0_8] : memref<3x64x128xbf16, #tpu.memory_space<vmem>>, vector<1x64x128xbf16>
    %12 = vector.shape_cast %11 : vector<1x64x128xbf16> to vector<64x128xbf16>
    %cst_9 = arith.constant dense<0.000000e+00> : vector<62x128xf32>
    %13 = tpu.matmul %10, %12, %cst_9 {dimension_numbers = #tpu.dot_dimension_numbers<[1], [0], [0], [1], [0, 0, 1, 1], [], []>} : vector<62x64xbf16>, vector<64x128xbf16>, vector<62x128xf32> -> vector<62x128xf32>
    %14 = arith.addf %9, %13 : vector<62x128xf32>
    %c0_10 = arith.constant 0 : index
    %c0_11 = arith.constant 0 : index
    %15 = vector.load %arg3[%c0_10, %c0_11] : memref<1x128xf32, #tpu.memory_space<vmem>>, vector<1x128xf32>
    %16 = vector.broadcast %15 : vector<1x128xf32> to vector<62x128xf32>
    %17 = arith.mulf %14, %16 : vector<62x128xf32>
    %c0_12 = arith.constant 0 : index
    %c0_13 = arith.constant 0 : index
    %18 = vector.load %arg4[%c0_12, %c0_13] : memref<1x128xf32, #tpu.memory_space<vmem>>, vector<1x128xf32>
    %19 = vector.broadcast %18 : vector<1x128xf32> to vector<62x128xf32>
    %20 = arith.addf %17, %19 : vector<62x128xf32>
    %cst_14 = arith.constant 0.000000e+00 : f32
    %21 = vector.broadcast %cst_14 : f32 to vector<62x128xf32>
    %22 = arith.maximumf %20, %21 : vector<62x128xf32>
    %23 = tpu.iota {dimensions = array<i32: 0>} : vector<62x1xi32>
    %c32_i32 = arith.constant 32 : i32
    %c0_i32 = arith.constant 0 : i32
    %24 = arith.cmpi eq, %c32_i32, %c0_i32 : i32
    %c1_i32 = arith.constant 1 : i32
    %25 = arith.select %24, %c1_i32, %c32_i32 : i32
    %26 = vector.broadcast %25 : i32 to vector<62x1xi32>
    %27 = arith.remsi %23, %26 : vector<62x1xi32>
    %c0_i32_15 = arith.constant 0 : i32
    %28 = vector.broadcast %c0_i32_15 : i32 to vector<62x1xi32>
    %29 = arith.cmpi ne, %27, %28 : vector<62x1xi32>
    %c0_i32_16 = arith.constant 0 : i32
    %30 = vector.broadcast %c0_i32_16 : i32 to vector<62x1xi32>
    %31 = arith.cmpi slt, %27, %30 : vector<62x1xi32>
    %c0_i32_17 = arith.constant 0 : i32
    %32 = arith.cmpi slt, %25, %c0_i32_17 : i32
    %33 = vector.broadcast %32 : i1 to vector<62x1xi1>
    %34 = vector.broadcast %33 : vector<62x1xi1> to vector<62x1xi1>
    %35 = arith.xori %31, %34 : vector<62x1xi1>
    %36 = arith.andi %35, %29 : vector<62x1xi1>
    %37 = vector.broadcast %25 : i32 to vector<62x1xi32>
    %38 = arith.addi %27, %37 : vector<62x1xi32>
    %39 = arith.select %36, %38, %27 : vector<62x1xi1>, vector<62x1xi32>
    %c16_i32 = arith.constant 16 : i32
    %40 = vector.broadcast %c16_i32 : i32 to vector<62x1xi32>
    %41 = arith.cmpi slt, %39, %40 : vector<62x1xi32>
    %cst_18 = arith.constant 0.000000e+00 : f32
    %42 = vector.shape_cast %41 : vector<62x1xi1> to vector<62x1xi1>
    %43 = vector.broadcast %42 : vector<62x1xi1> to vector<62x128xi1>
    %44 = vector.broadcast %cst_18 : f32 to vector<62x128xf32>
    %45 = arith.select %43, %22, %44 : vector<62x128xi1>, vector<62x128xf32>
    %46 = arith.truncf %45 : vector<62x128xf32> to vector<62x128xbf16>
    %cst_19 = arith.constant 0.000000e+00 : bf16
    %47 = vector.broadcast %cst_19 : bf16 to vector<1x128xbf16>
    %c0_20 = arith.constant 0 : index
    %c0_21 = arith.constant 0 : index
    %48 = vector.load %arg9[%c0_20, %c0_21] : memref<64x128xbf16, #tpu.memory_space<vmem>>, vector<1x128xbf16>
    tpu.vector_store %arg9[%c0_20, %c0_21], %47 {strides = array<i32>} : memref<64x128xbf16, #tpu.memory_space<vmem>>, vector<1x128xbf16>,
    %cst_22 = arith.constant 0.000000e+00 : bf16
    %49 = vector.broadcast %cst_22 : bf16 to vector<1x128xbf16>
    %c63 = arith.constant 63 : index
    %c0_23 = arith.constant 0 : index
    %50 = vector.load %arg9[%c63, %c0_23] : memref<64x128xbf16, #tpu.memory_space<vmem>>, vector<1x128xbf16>
    tpu.vector_store %arg9[%c63, %c0_23], %49 {strides = array<i32>} : memref<64x128xbf16, #tpu.memory_space<vmem>>, vector<1x128xbf16>,
    %c1_24 = arith.constant 1 : index
    %c0_25 = arith.constant 0 : index
    %51 = vector.load %arg9[%c1_24, %c0_25] : memref<64x128xbf16, #tpu.memory_space<vmem>>, vector<62x128xbf16>
    tpu.vector_store %arg9[%c1_24, %c0_25], %46 {strides = array<i32>} : memref<64x128xbf16, #tpu.memory_space<vmem>>, vector<62x128xbf16>,
    %c0_26 = arith.constant 0 : index
    %c0_27 = arith.constant 0 : index
    %52 = vector.load %arg9[%c0_26, %c0_27] : memref<64x128xbf16, #tpu.memory_space<vmem>>, vector<62x128xbf16>
    %c0_28 = arith.constant 0 : index
    %c0_29 = arith.constant 0 : index
    %c0_30 = arith.constant 0 : index
    %53 = vector.load %arg5[%c0_28, %c0_29, %c0_30] : memref<3x128x128xbf16, #tpu.memory_space<vmem>>, vector<1x128x128xbf16>
    %54 = vector.shape_cast %53 : vector<1x128x128xbf16> to vector<128x128xbf16>
    %cst_31 = arith.constant dense<0.000000e+00> : vector<62x128xf32>
    %55 = tpu.matmul %52, %54, %cst_31 {dimension_numbers = #tpu.dot_dimension_numbers<[1], [0], [0], [1], [0, 0, 1, 1], [], []>} : vector<62x128xbf16>, vector<128x128xbf16>, vector<62x128xf32> -> vector<62x128xf32>
    %c1_32 = arith.constant 1 : index
    %c0_33 = arith.constant 0 : index
    %56 = vector.load %arg9[%c1_32, %c0_33] : memref<64x128xbf16, #tpu.memory_space<vmem>>, vector<62x128xbf16>
    %c1_34 = arith.constant 1 : index
    %c0_35 = arith.constant 0 : index
    %c0_36 = arith.constant 0 : index
    %57 = vector.load %arg5[%c1_34, %c0_35, %c0_36] : memref<3x128x128xbf16, #tpu.memory_space<vmem>>, vector<1x128x128xbf16>
    %58 = vector.shape_cast %57 : vector<1x128x128xbf16> to vector<128x128xbf16>
    %cst_37 = arith.constant dense<0.000000e+00> : vector<62x128xf32>
    %59 = tpu.matmul %56, %58, %cst_37 {dimension_numbers = #tpu.dot_dimension_numbers<[1], [0], [0], [1], [0, 0, 1, 1], [], []>} : vector<62x128xbf16>, vector<128x128xbf16>, vector<62x128xf32> -> vector<62x128xf32>
    %60 = arith.addf %55, %59 : vector<62x128xf32>
    %c2_38 = arith.constant 2 : index
    %c0_39 = arith.constant 0 : index
    %61 = vector.load %arg9[%c2_38, %c0_39] : memref<64x128xbf16, #tpu.memory_space<vmem>>, vector<62x128xbf16>
    %c2_40 = arith.constant 2 : index
    %c0_41 = arith.constant 0 : index
    %c0_42 = arith.constant 0 : index
    %62 = vector.load %arg5[%c2_40, %c0_41, %c0_42] : memref<3x128x128xbf16, #tpu.memory_space<vmem>>, vector<1x128x128xbf16>
    %63 = vector.shape_cast %62 : vector<1x128x128xbf16> to vector<128x128xbf16>
    %cst_43 = arith.constant dense<0.000000e+00> : vector<62x128xf32>
    %64 = tpu.matmul %61, %63, %cst_43 {dimension_numbers = #tpu.dot_dimension_numbers<[1], [0], [0], [1], [0, 0, 1, 1], [], []>} : vector<62x128xbf16>, vector<128x128xbf16>, vector<62x128xf32> -> vector<62x128xf32>
    %65 = arith.addf %60, %64 : vector<62x128xf32>
    %c0_44 = arith.constant 0 : index
    %c0_45 = arith.constant 0 : index
    %66 = vector.load %arg6[%c0_44, %c0_45] : memref<1x128xf32, #tpu.memory_space<vmem>>, vector<1x128xf32>
    %67 = vector.broadcast %66 : vector<1x128xf32> to vector<62x128xf32>
    %68 = arith.mulf %65, %67 : vector<62x128xf32>
    %c0_46 = arith.constant 0 : index
    %c0_47 = arith.constant 0 : index
    %69 = vector.load %arg7[%c0_46, %c0_47] : memref<1x128xf32, #tpu.memory_space<vmem>>, vector<1x128xf32>
    %70 = vector.broadcast %69 : vector<1x128xf32> to vector<62x128xf32>
    %71 = arith.addf %68, %70 : vector<62x128xf32>
    %cst_48 = arith.constant 0.000000e+00 : f32
    %72 = vector.broadcast %cst_48 : f32 to vector<62x128xf32>
    %73 = arith.maximumf %71, %72 : vector<62x128xf32>
    %c0_49 = arith.constant 0 : index
    %c0_50 = arith.constant 0 : index
    %74 = vector.load %arg8[%c0_49, %c0_50] : memref<64x128xf32, #tpu.memory_space<vmem>>, vector<62x128xf32>
    tpu.vector_store %arg8[%c0_49, %c0_50], %73 {strides = array<i32>} : memref<64x128xf32, #tpu.memory_space<vmem>>, vector<62x128xf32>,
    %cst_51 = arith.constant 0.000000e+00 : f32
    %75 = vector.broadcast %cst_51 : f32 to vector<2x128xf32>
    %c62 = arith.constant 62 : index
    %c0_52 = arith.constant 0 : index
    %76 = vector.load %arg8[%c62, %c0_52] : memref<64x128xf32, #tpu.memory_space<vmem>>, vector<2x128xf32>
    tpu.vector_store %arg8[%c62, %c0_52], %75 {strides = array<i32>} : memref<64x128xf32, #tpu.memory_space<vmem>>, vector<2x128xf32>,
    return
  }
  func.func @transform_0(%arg0: i32) -> (i32, i32) {
    %c0_i32 = arith.constant 0 : i32
    %c0_i32_0 = arith.constant 0 : i32
    return %arg0, %c0_i32 : i32, i32
  }
  func.func @transform_1(%arg0: i32) -> (i32, i32, i32) {
    %c0_i32 = arith.constant 0 : i32
    %c0_i32_0 = arith.constant 0 : i32
    %c0_i32_1 = arith.constant 0 : i32
    %c0_i32_2 = arith.constant 0 : i32
    return %c0_i32, %c0_i32_0, %c0_i32_1 : i32, i32, i32
  }
  func.func @transform_2(%arg0: i32) -> (i32, i32) {
    %c0_i32 = arith.constant 0 : i32
    %c0_i32_0 = arith.constant 0 : i32
    %c0_i32_1 = arith.constant 0 : i32
    return %c0_i32, %c0_i32_0 : i32, i32
  }
  func.func @transform_3(%arg0: i32) -> (i32, i32) {
    %c0_i32 = arith.constant 0 : i32
    %c0_i32_0 = arith.constant 0 : i32
    %c0_i32_1 = arith.constant 0 : i32
    return %c0_i32, %c0_i32_0 : i32, i32
  }
  func.func @transform_4(%arg0: i32) -> (i32, i32, i32) {
    %c0_i32 = arith.constant 0 : i32
    %c0_i32_0 = arith.constant 0 : i32
    %c0_i32_1 = arith.constant 0 : i32
    %c0_i32_2 = arith.constant 0 : i32
    return %c0_i32, %c0_i32_0, %c0_i32_1 : i32, i32, i32
  }
  func.func @transform_5(%arg0: i32) -> (i32, i32) {
    %c0_i32 = arith.constant 0 : i32
    %c0_i32_0 = arith.constant 0 : i32
    %c0_i32_1 = arith.constant 0 : i32
    return %c0_i32, %c0_i32_0 : i32, i32
  }
  func.func @transform_6(%arg0: i32) -> (i32, i32) {
    %c0_i32 = arith.constant 0 : i32
    %c0_i32_0 = arith.constant 0 : i32
    %c0_i32_1 = arith.constant 0 : i32
    return %c0_i32, %c0_i32_0 : i32, i32
  }
  func.func @transform_7(%arg0: i32) -> (i32, i32) {
    %c0_i32 = arith.constant 0 : i32
    %c0_i32_0 = arith.constant 0 : i32
    return %arg0, %c0_i32 : i32, i32
  }
}

</mosaic_0001>

<llo_original>
// kernel: tpu_custom_call.1
$region0: #{tpu_custom_call.1}
  #allocation0 [shape = 'u32[]', space=smem, size = 0x4, offset = 0x4, fixed_abs, tag = 'smem constant byte address 0x4 - core index']
  #allocation1 [shape = 'u32[144,128]{1,0:T(1,128)}', space=vmem, size = 0x12000, scoped, tag = 'internal scratch']
  #allocation2 [shape = 'bf16[64,128]{1,0:T(16,128)(2,1)}', space=vmem, size = 0x4000, scoped, tag = 'scratch operand']
  %s0 = inlined_call_operand.hbm [shape: bf16[64,64], index: 0, kind: input, shape index: {}]
  %s1 = inlined_call_operand.hbm [shape: bf16[3,64,128], index: 1, kind: input, shape index: {}]
  %s2 = inlined_call_operand.vmem [shape: f32[1,128], index: 2, kind: input, shape index: {}]
  %s3 = inlined_call_operand.vmem [shape: f32[1,128], index: 3, kind: input, shape index: {}]
  %s4 = inlined_call_operand.hbm [shape: bf16[3,128,128], index: 4, kind: input, shape index: {}]
  %s5 = inlined_call_operand.vmem [shape: f32[1,128], index: 5, kind: input, shape index: {}]
  %s6 = inlined_call_operand.vmem [shape: f32[1,128], index: 6, kind: input, shape index: {}]
  %s7 = inlined_call_operand.hbm [shape: f32[64,128], index: 7, kind: output, shape index: {}]
  %s8 = sld [smem:[#allocation0]]
  $region50: #{tpu_custom_call.1} parent=0
    _
  %s10 = ssub.s32 1, %s8
  %s11 = scalar_select 0, %s10, %s8
  $region1: #{tpu_custom_call.1} parent=0
    #allocation3 [shape = 'u8[16384]{0}', space=vmem, size = 0x4000, scoped, tag = 'input window, operand 0, single buffered']
    #allocation4 [shape = 's32[1]{0}', space=sflag, size = 0x4, scoped, tag = 'scoped memory for tpu_custom_call.1']
    #allocation5 [shape = 's32[1]{0}', space=sflag, size = 0x4, scoped, tag = 'scoped memory for tpu_custom_call.1']
    #allocation6 [shape = 'u8[49152]{0}', space=vmem, size = 0xc000, scoped, tag = 'input window, operand 1, single buffered']
    #allocation7 [shape = 's32[1]{0}', space=sflag, size = 0x4, scoped, tag = 'scoped memory for tpu_custom_call.1']
    #allocation8 [shape = 'u8[98304]{0}', space=vmem, size = 0x18000, scoped, tag = 'input window, operand 4, single buffered']
    #allocation9 [shape = 'u8[32768]{0}', space=vmem, size = 0x8000, scoped, tag = 'output window, operand 0, single buffered']
    %12 = vsyncpa [#allocation4], 0
    %13 = vsyncpa [#allocation7], 0
    %14 = vsyncpa [#allocation5], 0
    // Predicated region
    $region2: #{tpu_custom_call.1} parent=1 // pred_check
      _
    $region3: #{tpu_custom_call.1} parent=1 // pred_check_branch
      %16 = sbr.rel (0) target = $region5
    $region4: #{tpu_custom_call.1} parent=1 // pred_region
      %s18 = ssub.s32 512, 512
      %19 = vsyncadd [#allocation4], %s18
      %s20 = sshll.u32 [#allocation3], 4
      %s21 = int_to_ptr.vmem [resolvable:$true] %s20
      %26 = dma.hbm_to_vmem [thread:$0]  %s0, 512, %s21, [#allocation4], 64, 64, 4
    $region5: #{tpu_custom_call.1} parent=1 // pred_fallthru
      _
    // Predicated region
    $region6: #{tpu_custom_call.1} parent=1 // pred_check
      _
    $region7: #{tpu_custom_call.1} parent=1 // pred_check_branch
      %28 = sbr.rel (0) target = $region9
    $region8: #{tpu_custom_call.1} parent=1 // pred_region
      %s30 = ssub.s32 1536, 1536
      %31 = vsyncadd [#allocation7], %s30
      %s32 = sshll.u32 [#allocation6], 4
      %s33 = int_to_ptr.vmem [resolvable:$true] %s32
      %38 = dma.hbm_to_vmem [thread:$0]  %s1, 1536, %s33, [#allocation7], 64, 64, 4
    $region9: #{tpu_custom_call.1} parent=1 // pred_fallthru
      _
    // Predicated region
    $region10: #{tpu_custom_call.1} parent=1 // pred_check
      _
    $region11: #{tpu_custom_call.1} parent=1 // pred_check_branch
      %40 = sbr.rel (0) target = $region13
    $region12: #{tpu_custom_call.1} parent=1 // pred_region
      _
    $region13: #{tpu_custom_call.1} parent=1 // pred_fallthru
      _
    // Predicated region
    $region14: #{tpu_custom_call.1} parent=1 // pred_check
      _
    $region15: #{tpu_custom_call.1} parent=1 // pred_check_branch
      %42 = sbr.rel (0) target = $region17
    $region16: #{tpu_custom_call.1} parent=1 // pred_region
      _
    $region17: #{tpu_custom_call.1} parent=1 // pred_fallthru
      _
    // Predicated region
    $region18: #{tpu_custom_call.1} parent=1 // pred_check
      _
    $region19: #{tpu_custom_call.1} parent=1 // pred_check_branch
      %44 = sbr.rel (0) target = $region21
    $region20: #{tpu_custom_call.1} parent=1 // pred_region
      %s46 = ssub.s32 3072, 3072
      %47 = vsyncadd [#allocation7], %s46
      %s48 = sshll.u32 [#allocation8], 4
      %s49 = int_to_ptr.vmem [resolvable:$true] %s48
      %54 = dma.hbm_to_vmem [thread:$0]  %s4, 3072, %s49, [#allocation7], 64, 64, 4
    $region21: #{tpu_custom_call.1} parent=1 // pred_fallthru
      _
    // Predicated region
    $region22: #{tpu_custom_call.1} parent=1 // pred_check
      _
    $region23: #{tpu_custom_call.1} parent=1 // pred_check_branch
      %56 = sbr.rel (0) target = $region25
    $region24: #{tpu_custom_call.1} parent=1 // pred_region
      _
    $region25: #{tpu_custom_call.1} parent=1 // pred_fallthru
      _
    // Predicated region
    $region26: #{tpu_custom_call.1} parent=1 // pred_check
      _
    $region27: #{tpu_custom_call.1} parent=1 // pred_check_branch
      %58 = sbr.rel (0) target = $region29
    $region28: #{tpu_custom_call.1} parent=1 // pred_region
      _
    $region29: #{tpu_custom_call.1} parent=1 // pred_fallthru
      _
    // Predicated region
    $region30: #{tpu_custom_call.1} parent=1 // pred_check
      _
    $region31: #{tpu_custom_call.1} parent=1 // pred_check_branch
      %60 = sbr.rel (0) target = $region33
    $region32: #{tpu_custom_call.1} parent=1 // pred_region
      %61 = dma.done [#allocation4], 512
    $region33: #{tpu_custom_call.1} parent=1 // pred_fallthru
      _
    // Predicated region
    $region34: #{tpu_custom_call.1} parent=1 // pred_check
      _
    $region35: #{tpu_custom_call.1} parent=1 // pred_check_branch
      %63 = sbr.rel (0) target = $region37
    $region36: #{tpu_custom_call.1} parent=1 // pred_region
      %64 = dma.done [#allocation7], 1536
    $region37: #{tpu_custom_call.1} parent=1 // pred_fallthru
      _
    // Predicated region
    $region38: #{tpu_custom_call.1} parent=1 // pred_check
      _
    $region39: #{tpu_custom_call.1} parent=1 // pred_check_branch
      %66 = sbr.rel (0) target = $region41
    $region40: #{tpu_custom_call.1} parent=1 // pred_region
      %67 = dma.done [#allocation7], 3072
    $region41: #{tpu_custom_call.1} parent=1 // pred_fallthru
      _
    %v69 = vld [vmem:[#allocation3] sm:$0xf]
    %v70 = vld [vmem:[#allocation3 + $0x4] sm:$0xf]
    %v71 = vld [vmem:[#allocation3 + $0x8] sm:$0xf]
    %v72 = vld [vmem:[#allocation3 + $0xc] sm:$0xf]
    %v73 = vld [vmem:[#allocation3 + $0x10] sm:$0xf]
    %v74 = vld [vmem:[#allocation3 + $0x14] sm:$0xf]
    %v75 = vld [vmem:[#allocation3 + $0x18] sm:$0xf]
    %v76 = vld [vmem:[#allocation3 + $0x1c] sm:$0xf]
    %v77 = vld [vmem:[#allocation6] sm:$0xf]
    %v78 = vld [vmem:[#allocation6 + $0x4] sm:$0xf]
    %v79 = vld [vmem:[#allocation6 + $0x8] sm:$0xf]
    %v80 = vld [vmem:[#allocation6 + $0xc] sm:$0xf]
    %v81 = vld [vmem:[#allocation6 + $0x10] sm:$0xf]
    %v82 = vld [vmem:[#allocation6 + $0x14] sm:$0xf]
    %v83 = vld [vmem:[#allocation6 + $0x18] sm:$0xf]
    %v84 = vld [vmem:[#allocation6 + $0x1c] sm:$0xf]
    %s85 = scalar_lea.vmem [#allocation6], 32
    %v86 = vld [vmem:[%s85] sm:$0xf]
    %v87 = vld [vmem:[%s85 + $0x4] sm:$0xf]
    %v88 = vld [vmem:[%s85 + $0x8] sm:$0xf]
    %v89 = vld [vmem:[%s85 + $0xc] sm:$0xf]
    %v90 = vld [vmem:[%s85 + $0x10] sm:$0xf]
    %v91 = vld [vmem:[%s85 + $0x14] sm:$0xf]
    %v92 = vld [vmem:[%s85 + $0x18] sm:$0xf]
    %v93 = vld [vmem:[%s85 + $0x1c] sm:$0xf]
    %v102 = vunpack.c.l.b16 %v69
    %v103 = vunpack.c.l.b16 %v70
    %v104 = vunpack.c.l.b16 %v71
    %v105 = vunpack.c.l.b16 %v72
    %v106 = vunpack.c.l.b16 %v73
    %v107 = vunpack.c.l.b16 %v74
    %v108 = vunpack.c.l.b16 %v75
    %v109 = vunpack.c.l.b16 %v76
    %v110 = vpack.c.b16 %v103, %v102
    %v111 = vpack.c.b16 %v105, %v104
    %v112 = vpack.c.b16 %v107, %v106
    %v113 = vpack.c.b16 %v109, %v108
    %vm114 = vsmask.f32 7424
    %v116 = vshrl.u32 %v110, 16
    %v118 = vshll.u32 %v110, 16
    %v120 = vrot.slane %v118, 1
    %v121 = vor.u32 %v116, %v120
    %v123 = vshll.u32 %v111, 16
    %v125 = vrot.slane %v123, 1
    %v126 = vsel %vm114, %v121, %v125
    %v127 = vshrl.u32 %v111, 16
    %v129 = vor.u32 %v127, %v125
    %v131 = vshll.u32 %v112, 16
    %v133 = vrot.slane %v131, 1
    %v134 = vsel %vm114, %v129, %v133
    %v135 = vshrl.u32 %v112, 16
    %v137 = vor.u32 %v135, %v133
    %v139 = vshll.u32 %v113, 16
    %v141 = vrot.slane %v139, 1
    %v142 = vsel %vm114, %v137, %v141
    %v143 = vshrl.u32 %v113, 16
    %v145 = vor.u32 %v143, %v141
    %v154 = vunpack.c.l.b16 %v86
    %v155 = vunpack.c.l.b16 %v87
    %v156 = vunpack.c.l.b16 %v88
    %v157 = vunpack.c.l.b16 %v89
    %v158 = vunpack.c.l.b16 %v90
    %v159 = vunpack.c.l.b16 %v91
    %v160 = vunpack.c.l.b16 %v92
    %v161 = vunpack.c.l.b16 %v93
    %v162 = vpack.c.b16 %v155, %v154
    %v163 = vpack.c.b16 %v157, %v156
    %v164 = vpack.c.b16 %v159, %v158
    %v165 = vpack.c.b16 %v161, %v160
    %vm170 = vcmask 523264
    %v172 = vsel %vm170, %v126, 0
    %v175 = vsel %vm170, %v134, 0
    %v178 = vsel %vm170, %v142, 0
    %v181 = vsel %vm170, %v145, 0
    %183 = vmatprep.subr.bf16.mxu0 0
    %184 = vmatpush1.bf16.msra.mxu0 %v162
    %185 = vmatprep.subr.bf16.mxu0 0
    %186 = vmatpush1.bf16.msra.mxu0 %v163
    %187 = vmatprep.subr.bf16.mxu0 0
    %188 = vmatpush1.bf16.msra.mxu0 %v164
    %189 = vmatprep.subr.bf16.mxu0 0
    %190 = vmatpush1.bf16.msra.mxu0 %v165
    %191 = vmatprep.subr.bf16.mxu0 0
    %192 = vmatpush1.bf16.msra.mxu0 0
    %193 = vmatprep.subr.bf16.mxu0 0
    %194 = vmatpush1.bf16.msra.mxu0 0
    %195 = vmatprep.subr.bf16.mxu0 0
    %196 = vmatpush1.bf16.msra.mxu0 0
    %197 = vmatprep.subr.bf16.mxu0 0
    %198 = vmatpush1.bf16.msra.mxu0 0
    %199 = vmatprep.subr.bf16.mxu0 0
    %200 = vmatpush1.bf16.msra.mxu0 0
    %201 = vmatprep.subr.bf16.mxu0 0
    %202 = vmatpush1.bf16.msra.mxu0 0
    %203 = vmatprep.subr.bf16.mxu0 0
    %204 = vmatpush1.bf16.msra.mxu0 0
    %205 = vmatprep.subr.bf16.mxu0 0
    %206 = vmatpush1.bf16.msra.mxu0 0
    %207 = vmatprep.subr.bf16.mxu0 0
    %208 = vmatpush1.bf16.msra.mxu0 0
    %209 = vmatprep.subr.bf16.mxu0 0
    %210 = vmatpush1.bf16.msra.mxu0 0
    %211 = vmatprep.subr.bf16.mxu0 0
    %212 = vmatpush1.bf16.msra.mxu0 0
    %213 = vmatprep.subr.bf16.mxu0 0
    %214 = vmatpush1.bf16.msra.mxu0 0
    %215 = vmatprep.mubr.bf16.mxu0 0
    %216 = vmatmul.mubr.bf16.gmra.mrb[0].mxu0 %v172
    %v217 = vpop.f32.mrb[0].mxu0
    %v218 = vadd.f32 0.0, %v217
    %v219 = vpop.f32.mrb[0].mxu0
    %v220 = vpop.f32.mrb[0].mxu0
    %v221 = vadd.f32 0.0, %v220
    %v222 = vpop.f32.mrb[0].mxu0
    %223 = vmatprep.mubr.bf16.mxu0 0
    %224 = vmatmul.mubr.bf16.gmra.mrb[0].mxu0 %v175
    %v225 = vpop.f32.mrb[0].mxu0
    %v226 = vadd.f32 0.0, %v225
    %v227 = vpop.f32.mrb[0].mxu0
    %v228 = vpop.f32.mrb[0].mxu0
    %v229 = vadd.f32 0.0, %v228
    %v230 = vpop.f32.mrb[0].mxu0
    %231 = vmatprep.mubr.bf16.mxu0 0
    %232 = vmatmul.mubr.bf16.gmra.mrb[0].mxu0 %v178
    %v233 = vpop.f32.mrb[0].mxu0
    %v234 = vadd.f32 0.0, %v233
    %v235 = vpop.f32.mrb[0].mxu0
    %v236 = vpop.f32.mrb[0].mxu0
    %v237 = vadd.f32 0.0, %v236
    %v238 = vpop.f32.mrb[0].mxu0
    %239 = vmatprep.mubr.bf16.mxu0 0
    %240 = vmatmul.mubr.bf16.gmra.mrb[0].mxu0 %v181
    %v241 = vpop.f32.mrb[0].mxu0
    %v242 = vadd.f32 0.0, %v241
    %v243 = vpop.f32.mrb[0].mxu0
    %v244 = vpop.f32.mrb[0].mxu0
    %v245 = vadd.f32 0.0, %v244
    %v246 = vpop.f32.mrb[0].mxu0
    %247 = vdwg.mxu0
    %v256 = vunpack.c.l.b16 %v77
    %v257 = vunpack.c.l.b16 %v78
    %v258 = vunpack.c.l.b16 %v79
    %v259 = vunpack.c.l.b16 %v80
    %v260 = vunpack.c.l.b16 %v81
    %v261 = vunpack.c.l.b16 %v82
    %v262 = vunpack.c.l.b16 %v83
    %v263 = vunpack.c.l.b16 %v84
    %v264 = vpack.c.b16 %v257, %v256
    %v265 = vpack.c.b16 %v259, %v258
    %v266 = vpack.c.b16 %v261, %v260
    %v267 = vpack.c.b16 %v263, %v262
    %v272 = vsel %vm170, %v110, 0
    %v274 = vsel %vm170, %v111, 0
    %v276 = vsel %vm170, %v112, 0
    %v278 = vsel %vm170, %v113, 0
    %280 = vmatprep.subr.bf16.mxu0 0
    %281 = vmatpush1.bf16.msra.mxu0 %v264
    %282 = vmatprep.subr.bf16.mxu0 0
    %283 = vmatpush1.bf16.msra.mxu0 %v265
    %284 = vmatprep.subr.bf16.mxu0 0
    %285 = vmatpush1.bf16.msra.mxu0 %v266
    %286 = vmatprep.subr.bf16.mxu0 0
    %287 = vmatpush1.bf16.msra.mxu0 %v267
    %288 = vmatprep.subr.bf16.mxu0 0
    %289 = vmatpush1.bf16.msra.mxu0 0
    %290 = vmatprep.subr.bf16.mxu0 0
    %291 = vmatpush1.bf16.msra.mxu0 0
    %292 = vmatprep.subr.bf16.mxu0 0
    %293 = vmatpush1.bf16.msra.mxu0 0
    %294 = vmatprep.subr.bf16.mxu0 0
    %295 = vmatpush1.bf16.msra.mxu0 0
    %296 = vmatprep.subr.bf16.mxu0 0
    %297 = vmatpush1.bf16.msra.mxu0 0
    %298 = vmatprep.subr.bf16.mxu0 0
    %299 = vmatpush1.bf16.msra.mxu0 0
    %300 = vmatprep.subr.bf16.mxu0 0
    %301 = vmatpush1.bf16.msra.mxu0 0
    %302 = vmatprep.subr.bf16.mxu0 0
    %303 = vmatpush1.bf16.msra.mxu0 0
    %304 = vmatprep.subr.bf16.mxu0 0
    %305 = vmatpush1.bf16.msra.mxu0 0
    %306 = vmatprep.subr.bf16.mxu0 0
    %307 = vmatpush1.bf16.msra.mxu0 0
    %308 = vmatprep.subr.bf16.mxu0 0
    %309 = vmatpush1.bf16.msra.mxu0 0
    %310 = vmatprep.subr.bf16.mxu0 0
    %311 = vmatpush1.bf16.msra.mxu0 0
    %312 = vmatprep.mubr.bf16.mxu0 0
    %313 = vmatmul.mubr.bf16.gmra.mrb[0].mxu0 %v272
    %v314 = vpop.f32.mrb[0].mxu0
    %v315 = vadd.f32 %v218, %v314
    %v316 = vpop.f32.mrb[0].mxu0
    %v317 = vpop.f32.mrb[0].mxu0
    %v318 = vadd.f32 %v221, %v317
    %v319 = vpop.f32.mrb[0].mxu0
    %320 = vmatprep.mubr.bf16.mxu0 0
    %321 = vmatmul.mubr.bf16.gmra.mrb[0].mxu0 %v274
    %v322 = vpop.f32.mrb[0].mxu0
    %v323 = vadd.f32 %v226, %v322
    %v324 = vpop.f32.mrb[0].mxu0
    %v325 = vpop.f32.mrb[0].mxu0
    %v326 = vadd.f32 %v229, %v325
    %v327 = vpop.f32.mrb[0].mxu0
    %328 = vmatprep.mubr.bf16.mxu0 0
    %329 = vmatmul.mubr.bf16.gmra.mrb[0].mxu0 %v276
    %v330 = vpop.f32.mrb[0].mxu0
    %v331 = vadd.f32 %v234, %v330
    %v332 = vpop.f32.mrb[0].mxu0
    %v333 = vpop.f32.mrb[0].mxu0
    %v334 = vadd.f32 %v237, %v333
    %v335 = vpop.f32.mrb[0].mxu0
    %336 = vmatprep.mubr.bf16.mxu0 0
    %337 = vmatmul.mubr.bf16.gmra.mrb[0].mxu0 %v278
    %v338 = vpop.f32.mrb[0].mxu0
    %v339 = vadd.f32 %v242, %v338
    %v340 = vpop.f32.mrb[0].mxu0
    %v341 = vpop.f32.mrb[0].mxu0
    %v342 = vadd.f32 %v245, %v341
    %v343 = vpop.f32.mrb[0].mxu0
    %344 = vdwg.mxu0
    %s345 = scalar_lea.vmem [#allocation6], 64
    %v346 = vld [vmem:[%s345] sm:$0xf]
    %v347 = vld [vmem:[%s345 + $0x4] sm:$0xf]
    %v348 = vld [vmem:[%s345 + $0x8] sm:$0xf]
    %v349 = vld [vmem:[%s345 + $0xc] sm:$0xf]
    %v350 = vld [vmem:[%s345 + $0x10] sm:$0xf]
    %v351 = vld [vmem:[%s345 + $0x14] sm:$0xf]
    %v352 = vld [vmem:[%s345 + $0x18] sm:$0xf]
    %v353 = vld [vmem:[%s345 + $0x1c] sm:$0xf]
    %vm354 = vcmask 1046528
    %v355 = vrot.slane %v110, 1
    %v356 = vrot.slane %v111, 1
    %v357 = vsel %vm354, %v355, %v356
    %v358 = vrot.slane %v112, 1
    %v359 = vsel %vm354, %v356, %v358
    %v360 = vrot.slane %v113, 1
    %v361 = vsel %vm354, %v358, %v360
    %v370 = vunpack.c.l.b16 %v346
    %v371 = vunpack.c.l.b16 %v347
    %v372 = vunpack.c.l.b16 %v348
    %v373 = vunpack.c.l.b16 %v349
    %v374 = vunpack.c.l.b16 %v350
    %v375 = vunpack.c.l.b16 %v351
    %v376 = vunpack.c.l.b16 %v352
    %v377 = vunpack.c.l.b16 %v353
    %v378 = vpack.c.b16 %v371, %v370
    %v379 = vpack.c.b16 %v373, %v372
    %v380 = vpack.c.b16 %v375, %v374
    %v381 = vpack.c.b16 %v377, %v376
    %v387 = vsel %vm170, %v357, 0
    %v390 = vsel %vm170, %v359, 0
    %v393 = vsel %vm170, %v361, 0
    %v396 = vsel %vm170, %v360, 0
    %398 = vmatprep.subr.bf16.mxu0 0
    %399 = vmatpush1.bf16.msra.mxu0 %v378
    %400 = vmatprep.subr.bf16.mxu0 0
    %401 = vmatpush1.bf16.msra.mxu0 %v379
    %402 = vmatprep.subr.bf16.mxu0 0
    %403 = vmatpush1.bf16.msra.mxu0 %v380
    %404 = vmatprep.subr.bf16.mxu0 0
    %405 = vmatpush1.bf16.msra.mxu0 %v381
    %406 = vmatprep.subr.bf16.mxu0 0
    %407 = vmatpush1.bf16.msra.mxu0 0
    %408 = vmatprep.subr.bf16.mxu0 0
    %409 = vmatpush1.bf16.msra.mxu0 0
    %410 = vmatprep.subr.bf16.mxu0 0
    %411 = vmatpush1.bf16.msra.mxu0 0
    %412 = vmatprep.subr.bf16.mxu0 0
    %413 = vmatpush1.bf16.msra.mxu0 0
    %414 = vmatprep.subr.bf16.mxu0 0
    %415 = vmatpush1.bf16.msra.mxu0 0
    %416 = vmatprep.subr.bf16.mxu0 0
    %417 = vmatpush1.bf16.msra.mxu0 0
    %418 = vmatprep.subr.bf16.mxu0 0
    %419 = vmatpush1.bf16.msra.mxu0 0
    %420 = vmatprep.subr.bf16.mxu0 0
    %421 = vmatpush1.bf16.msra.mxu0 0
    %422 = vmatprep.subr.bf16.mxu0 0
    %423 = vmatpush1.bf16.msra.mxu0 0
    %424 = vmatprep.subr.bf16.mxu0 0
    %425 = vmatpush1.bf16.msra.mxu0 0
    %426 = vmatprep.subr.bf16.mxu0 0
    %427 = vmatpush1.bf16.msra.mxu0 0
    %428 = vmatprep.subr.bf16.mxu0 0
    %429 = vmatpush1.bf16.msra.mxu0 0
    %430 = vmatprep.mubr.bf16.mxu0 0
    %431 = vmatmul.mubr.bf16.gmra.mrb[0].mxu0 %v387
    %v432 = vpop.f32.mrb[0].mxu0
    %v433 = vadd.f32 0.0, %v432
    %v434 = vpop.f32.mrb[0].mxu0
    %v435 = vpop.f32.mrb[0].mxu0
    %v436 = vadd.f32 0.0, %v435
    %v437 = vpop.f32.mrb[0].mxu0
    %438 = vmatprep.mubr.bf16.mxu0 0
    %439 = vmatmul.mubr.bf16.gmra.mrb[0].mxu0 %v390
    %v440 = vpop.f32.mrb[0].mxu0
    %v441 = vadd.f32 0.0, %v440
    %v442 = vpop.f32.mrb[0].mxu0
    %v443 = vpop.f32.mrb[0].mxu0
    %v444 = vadd.f32 0.0, %v443
    %v445 = vpop.f32.mrb[0].mxu0
    %446 = vmatprep.mubr.bf16.mxu0 0
    %447 = vmatmul.mubr.bf16.gmra.mrb[0].mxu0 %v393
    %v448 = vpop.f32.mrb[0].mxu0
    %v449 = vadd.f32 0.0, %v448
    %v450 = vpop.f32.mrb[0].mxu0
    %v451 = vpop.f32.mrb[0].mxu0
    %v452 = vadd.f32 0.0, %v451
    %v453 = vpop.f32.mrb[0].mxu0
    %454 = vmatprep.mubr.bf16.mxu0 0
    %455 = vmatmul.mubr.bf16.gmra.mrb[0].mxu0 %v396
    %v456 = vpop.f32.mrb[0].mxu0
    %v457 = vadd.f32 0.0, %v456
    %v458 = vpop.f32.mrb[0].mxu0
    %v459 = vpop.f32.mrb[0].mxu0
    %v460 = vadd.f32 0.0, %v459
    %v461 = vpop.f32.mrb[0].mxu0
    %462 = vdwg.mxu0
    %v463 = vadd.f32 %v315, %v433
    %v464 = vadd.f32 %v318, %v436
    %v465 = vadd.f32 %v323, %v441
    %v466 = vadd.f32 %v326, %v444
    %v467 = vadd.f32 %v331, %v449
    %v468 = vadd.f32 %v334, %v452
    %v469 = vadd.f32 %v339, %v457
    %v470 = vadd.f32 %v342, %v460
    %v471 = vld [vmem:[%s2] sm:$0x1]
    %v473 = vlaneseq
    %v474 = vshrl.u32 %v473, 7
    %v475 = vsub.s32 0, %v474
    %v476 = vrot.slane %v471, %v475
    %v478 = vmul.f32 %v463, %v476
    %v479 = vmul.f32 %v464, %v476
    %v480 = vmul.f32 %v465, %v476
    %v481 = vmul.f32 %v466, %v476
    %v482 = vmul.f32 %v467, %v476
    %v483 = vmul.f32 %v468, %v476
    %v484 = vmul.f32 %v469, %v476
    %v485 = vmul.f32 %v470, %v476
    %v486 = vld [vmem:[%s3] sm:$0x1]
    %v488 = vlaneseq
    %v489 = vshrl.u32 %v488, 7
    %v490 = vsub.s32 0, %v489
    %v491 = vrot.slane %v486, %v490
    %v493 = vadd.f32 %v478, %v491
    %v494 = vadd.f32 %v479, %v491
    %v495 = vadd.f32 %v480, %v491
    %v496 = vadd.f32 %v481, %v491
    %v497 = vadd.f32 %v482, %v491
    %v498 = vadd.f32 %v483, %v491
    %v499 = vadd.f32 %v484, %v491
    %v500 = vadd.f32 %v485, %v491
    %v501 = vmax.f32 %v493, 0.0
    %v502 = vmax.f32 %v494, 0.0
    %v503 = vmax.f32 %v495, 0.0
    %v504 = vmax.f32 %v496, 0.0
    %v505 = vmax.f32 %v497, 0.0
    %v506 = vmax.f32 %v498, 0.0
    %v507 = vmax.f32 %v499, 0.0
    %v508 = vmax.f32 %v500, 0.0
    %v509 = vlaneseq
    %v510 = vshrl.u32 %v509, 7
    %v511 = vadd.s32 %v510, 8
    %v512 = vadd.s32 %v510, 16
    %v513 = vadd.s32 %v510, 24
    %v514 = vadd.s32 %v510, 32
    %v515 = vadd.s32 %v510, 40
    %v516 = vadd.s32 %v510, 48
    %v517 = vadd.s32 %v510, 56
    %vm518 = vcmp.lt.s32.totalorder %v510, 0
    %v519 = vsub.s32 0, %v510
    %v520 = vsel %vm518, %v519, %v510
    %v521 = vshrl.u32 %v520, 5
    %v522 = vand.u32 %v520, 31
    %v523 = vsub.s32 0, %v522
    %v524 = vsel %vm518, %v523, %v522
    %vm525 = vcmp.lt.s32.totalorder %v511, 0
    %v526 = vsub.s32 0, %v511
    %v527 = vsel %vm525, %v526, %v511
    %v528 = vshrl.u32 %v527, 5
    %v529 = vand.u32 %v527, 31
    %v530 = vsub.s32 0, %v529
    %v531 = vsel %vm525, %v530, %v529
    %vm532 = vcmp.lt.s32.totalorder %v512, 0
    %v533 = vsub.s32 0, %v512
    %v534 = vsel %vm532, %v533, %v512
    %v535 = vshrl.u32 %v534, 5
    %v536 = vand.u32 %v534, 31
    %v537 = vsub.s32 0, %v536
    %v538 = vsel %vm532, %v537, %v536
    %vm539 = vcmp.lt.s32.totalorder %v513, 0
    %v540 = vsub.s32 0, %v513
    %v541 = vsel %vm539, %v540, %v513
    %v542 = vshrl.u32 %v541, 5
    %v543 = vand.u32 %v541, 31
    %v544 = vsub.s32 0, %v543
    %v545 = vsel %vm539, %v544, %v543
    %vm546 = vcmp.lt.s32.totalorder %v514, 0
    %v547 = vsub.s32 0, %v514
    %v548 = vsel %vm546, %v547, %v514
    %v549 = vshrl.u32 %v548, 5
    %v550 = vand.u32 %v548, 31
    %v551 = vsub.s32 0, %v550
    %v552 = vsel %vm546, %v551, %v550
    %vm553 = vcmp.lt.s32.totalorder %v515, 0
    %v554 = vsub.s32 0, %v515
    %v555 = vsel %vm553, %v554, %v515
    %v556 = vshrl.u32 %v555, 5
    %v557 = vand.u32 %v555, 31
    %v558 = vsub.s32 0, %v557
    %v559 = vsel %vm553, %v558, %v557
    %vm560 = vcmp.lt.s32.totalorder %v516, 0
    %v561 = vsub.s32 0, %v516
    %v562 = vsel %vm560, %v561, %v516
    %v563 = vshrl.u32 %v562, 5
    %v564 = vand.u32 %v562, 31
    %v565 = vsub.s32 0, %v564
    %v566 = vsel %vm560, %v565, %v564
    %vm567 = vcmp.lt.s32.totalorder %v517, 0
    %v568 = vsub.s32 0, %v517
    %v569 = vsel %vm567, %v568, %v517
    %v570 = vshrl.u32 %v569, 5
    %v571 = vand.u32 %v569, 31
    %v572 = vsub.s32 0, %v571
    %v573 = vsel %vm567, %v572, %v571
    %vm574 = vcmp.ne.s32.totalorder %v524, 0
    %vm575 = vcmp.ne.s32.totalorder %v531, 0
    %vm576 = vcmp.ne.s32.totalorder %v538, 0
    %vm577 = vcmp.ne.s32.totalorder %v545, 0
    %vm578 = vcmp.ne.s32.totalorder %v552, 0
    %vm579 = vcmp.ne.s32.totalorder %v559, 0
    %vm580 = vcmp.ne.s32.totalorder %v566, 0
    %vm581 = vcmp.ne.s32.totalorder %v573, 0
    %vm582 = vcmp.lt.s32.totalorder %v524, 0
    %vm583 = vcmp.lt.s32.totalorder %v531, 0
    %vm584 = vcmp.lt.s32.totalorder %v538, 0
    %vm585 = vcmp.lt.s32.totalorder %v545, 0
    %vm586 = vcmp.lt.s32.totalorder %v552, 0
    %vm587 = vcmp.lt.s32.totalorder %v559, 0
    %vm588 = vcmp.lt.s32.totalorder %v566, 0
    %vm589 = vcmp.lt.s32.totalorder %v573, 0
    %vm590 = vmand %vm582, %vm574
    %vm591 = vmand %vm583, %vm575
    %vm592 = vmand %vm584, %vm576
    %vm593 = vmand %vm585, %vm577
    %vm594 = vmand %vm586, %vm578
    %vm595 = vmand %vm587, %vm579
    %vm596 = vmand %vm588, %vm580
    %vm597 = vmand %vm589, %vm581
    %v598 = vadd.s32 %v524, 32
    %v599 = vadd.s32 %v531, 32
    %v600 = vadd.s32 %v538, 32
    %v601 = vadd.s32 %v545, 32
    %v602 = vadd.s32 %v552, 32
    %v603 = vadd.s32 %v559, 32
    %v604 = vadd.s32 %v566, 32
    %v605 = vadd.s32 %v573, 32
    %v606 = vsel %vm590, %v598, %v524
    %v607 = vsel %vm591, %v599, %v531
    %v608 = vsel %vm592, %v600, %v538
    %v609 = vsel %vm593, %v601, %v545
    %v610 = vsel %vm594, %v602, %v552
    %v611 = vsel %vm595, %v603, %v559
    %v612 = vsel %vm596, %v604, %v566
    %v613 = vsel %vm597, %v605, %v573
    %vm614 = vcmp.lt.s32.totalorder %v606, 16
    %vm615 = vcmp.lt.s32.totalorder %v607, 16
    %vm616 = vcmp.lt.s32.totalorder %v608, 16
    %vm617 = vcmp.lt.s32.totalorder %v609, 16
    %vm618 = vcmp.lt.s32.totalorder %v610, 16
    %vm619 = vcmp.lt.s32.totalorder %v611, 16
    %vm620 = vcmp.lt.s32.totalorder %v612, 16
    %vm621 = vcmp.lt.s32.totalorder %v613, 16
    %v622 = vsel %vm614, 1, 0
    %v623 = vsel %vm615, 1, 0
    %v624 = vsel %vm616, 1, 0
    %v625 = vsel %vm617, 1, 0
    %v626 = vsel %vm618, 1, 0
    %v627 = vsel %vm619, 1, 0
    %v628 = vsel %vm620, 1, 0
    %v629 = vsel %vm621, 1, 0
    %vm630 = vcmp.eq.s32.totalorder %v622, 1
    %vm631 = vcmp.eq.s32.totalorder %v623, 1
    %vm632 = vcmp.eq.s32.totalorder %v624, 1
    %vm633 = vcmp.eq.s32.totalorder %v625, 1
    %vm634 = vcmp.eq.s32.totalorder %v626, 1
    %vm635 = vcmp.eq.s32.totalorder %v627, 1
    %vm636 = vcmp.eq.s32.totalorder %v628, 1
    %vm637 = vcmp.eq.s32.totalorder %v629, 1
    %v638 = vsel %vm630, %v501, 0.0
    %v639 = vsel %vm631, %v502, 0.0
    %v640 = vsel %vm632, %v503, 0.0
    %v641 = vsel %vm633, %v504, 0.0
    %v642 = vsel %vm634, %v505, 0.0
    %v643 = vsel %vm635, %v506, 0.0
    %v644 = vsel %vm636, %v507, 0.0
    %v645 = vsel %vm637, %v508, 0.0
    %v646 = vpack.c.bf16 %v639, %v638
    %v647 = vpack.c.bf16 %v641, %v640
    %v648 = vpack.c.bf16 %v643, %v642
    %v649 = vpack.c.bf16 %v645, %v644
    %vm650 = vcmask 1040384
    %vm651 = vsmask.f32 256
    %vm652 = vmand %vm650, %vm651
    %v653 = vld [vmem:[#allocation2] sm:$0x1]
    %v654 = vsel %vm652, 0, %v653
    %655 = vst [vmem:[#allocation2] sm:$0x1] %v654
    %vm656 = vcmask 1047559
    %vm657 = vsmask.f32 7966
    %vm658 = vmand %vm656, %vm657
    %v659 = vld [vmem:[#allocation2 + $0x18] sm:$0x80]
    %v660 = vsel %vm658, 0, %v659
    %661 = vst [vmem:[#allocation2 + $0x18] sm:$0x80] %v660
    %v663 = vshrl.u32 %v646, 16
    %v665 = vrot.slane %v663, 7
    %v666 = vshll.u32 %v646, 16
    %v668 = vor.u32 %v665, %v666
    %v670 = vshrl.u32 %v647, 16
    %v672 = vrot.slane %v670, 7
    %v673 = vshll.u32 %v647, 16
    %v675 = vor.u32 %v672, %v673
    %v676 = vsel %vm651, %v665, %v675
    %v678 = vshrl.u32 %v648, 16
    %v680 = vrot.slane %v678, 7
    %v681 = vshll.u32 %v648, 16
    %v683 = vor.u32 %v680, %v681
    %v684 = vsel %vm651, %v672, %v683
    %v686 = vshrl.u32 %v649, 16
    %v688 = vrot.slane %v686, 7
    %v689 = vshll.u32 %v649, 16
    %v691 = vor.u32 %v688, %v689
    %v692 = vsel %vm651, %v680, %v691
    %vm697 = vcmask 1047552
    %vm698 = vsmask.f32 7938
    %vm699 = vmand %vm697, %vm698
    %v700 = vld [vmem:[#allocation2] sm:$0xff]
    %v701 = vsel %vm699, %v668, %v700
    %702 = vst [vmem:[#allocation2] sm:$0xff] %v701
    %703 = vst [vmem:[#allocation2 + $0x8] sm:$0xff] %v676
    %704 = vst [vmem:[#allocation2 + $0x10] sm:$0xff] %v684
    %vm705 = vmand %vm697, %vm114
    %v706 = vld [vmem:[#allocation2 + $0x18] sm:$0xff]
    %v707 = vsel %vm705, %v692, %v706
    %708 = vst [vmem:[#allocation2 + $0x18] sm:$0xff] %v707
    %v709 = vld [vmem:[#allocation2] sm:$0xff]
    %v710 = vld [vmem:[#allocation2 + $0x8] sm:$0xff]
    %v711 = vld [vmem:[#allocation2 + $0x10] sm:$0xff]
    %v712 = vld [vmem:[#allocation2 + $0x18] sm:$0x7f]
    %v713 = vld [vmem:[#allocation8] sm:$0xf]
    %v714 = vld [vmem:[#allocation8 + $0x4] sm:$0xf]
    %v715 = vld [vmem:[#allocation8 + $0x8] sm:$0xf]
    %v716 = vld [vmem:[#allocation8 + $0xc] sm:$0xf]
    %v717 = vld [vmem:[#allocation8 + $0x10] sm:$0xf]
    %v718 = vld [vmem:[#allocation8 + $0x14] sm:$0xf]
    %v719 = vld [vmem:[#allocation8 + $0x18] sm:$0xf]
    %v720 = vld [vmem:[#allocation8 + $0x1c] sm:$0xf]
    %v721 = vld [vmem:[#allocation8 + $0x20] sm:$0xf]
    %v722 = vld [vmem:[#allocation8 + $0x24] sm:$0xf]
    %v723 = vld [vmem:[#allocation8 + $0x28] sm:$0xf]
    %v724 = vld [vmem:[#allocation8 + $0x2c] sm:$0xf]
    %v725 = vld [vmem:[#allocation8 + $0x30] sm:$0xf]
    %v726 = vld [vmem:[#allocation8 + $0x34] sm:$0xf]
    %v727 = vld [vmem:[#allocation8 + $0x38] sm:$0xf]
    %v728 = vld [vmem:[#allocation8 + $0x3c] sm:$0xf]
    %v729 = vld [vmem:[#allocation2 + $0x18] sm:$0xff]
    %s730 = scalar_lea.vmem [#allocation8], 64
    %v731 = vld [vmem:[%s730] sm:$0xf]
    %v732 = vld [vmem:[%s730 + $0x4] sm:$0xf]
    %v733 = vld [vmem:[%s730 + $0x8] sm:$0xf]
    %v734 = vld [vmem:[%s730 + $0xc] sm:$0xf]
    %v735 = vld [vmem:[%s730 + $0x10] sm:$0xf]
    %v736 = vld [vmem:[%s730 + $0x14] sm:$0xf]
    %v737 = vld [vmem:[%s730 + $0x18] sm:$0xf]
    %v738 = vld [vmem:[%s730 + $0x1c] sm:$0xf]
    %v739 = vld [vmem:[%s730 + $0x20] sm:$0xf]
    %v740 = vld [vmem:[%s730 + $0x24] sm:$0xf]
    %v741 = vld [vmem:[%s730 + $0x28] sm:$0xf]
    %v742 = vld [vmem:[%s730 + $0x2c] sm:$0xf]
    %v743 = vld [vmem:[%s730 + $0x30] sm:$0xf]
    %v744 = vld [vmem:[%s730 + $0x34] sm:$0xf]
    %v745 = vld [vmem:[%s730 + $0x38] sm:$0xf]
    %v746 = vld [vmem:[%s730 + $0x3c] sm:$0xf]
    %v748 = vshrl.u32 %v709, 16
    %v750 = vshll.u32 %v709, 16
    %v752 = vrot.slane %v750, 1
    %v753 = vor.u32 %v748, %v752
    %v755 = vshll.u32 %v710, 16
    %v757 = vrot.slane %v755, 1
    %v758 = vsel %vm114, %v753, %v757
    %v759 = vshrl.u32 %v710, 16
    %v761 = vor.u32 %v759, %v757
    %v763 = vshll.u32 %v711, 16
    %v765 = vrot.slane %v763, 1
    %v766 = vsel %vm114, %v761, %v765
    %v767 = vshrl.u32 %v711, 16
    %v769 = vor.u32 %v767, %v765
    %v771 = vshll.u32 %v729, 16
    %v773 = vrot.slane %v771, 1
    %v774 = vsel %vm114, %v769, %v773
    %v775 = vshrl.u32 %v729, 16
    %v777 = vor.u32 %v775, %v773
    %v798 = vunpack.c.l.b16 %v731
    %v799 = vunpack.c.l.b16 %v732
    %v800 = vunpack.c.l.b16 %v733
    %v801 = vunpack.c.l.b16 %v734
    %v802 = vunpack.c.l.b16 %v735
    %v803 = vunpack.c.l.b16 %v736
    %v804 = vunpack.c.l.b16 %v737
    %v805 = vunpack.c.l.b16 %v738
    %v806 = vunpack.c.l.b16 %v739
    %v807 = vunpack.c.l.b16 %v740
    %v808 = vunpack.c.l.b16 %v741
    %v809 = vunpack.c.l.b16 %v742
    %v810 = vunpack.c.l.b16 %v743
    %v811 = vunpack.c.l.b16 %v744
    %v812 = vunpack.c.l.b16 %v745
    %v813 = vunpack.c.l.b16 %v746
    %v814 = vpack.c.b16 %v799, %v798
    %v815 = vpack.c.b16 %v801, %v800
    %v816 = vpack.c.b16 %v803, %v802
    %v817 = vpack.c.b16 %v805, %v804
    %v818 = vpack.c.b16 %v807, %v806
    %v819 = vpack.c.b16 %v809, %v808
    %v820 = vpack.c.b16 %v811, %v810
    %v821 = vpack.c.b16 %v813, %v812
    %830 = vmatprep.subr.bf16.mxu0 0
    %831 = vmatpush1.bf16.msra.mxu0 %v814
    %832 = vmatprep.subr.bf16.mxu0 0
    %833 = vmatpush1.bf16.msra.mxu0 %v815
    %834 = vmatprep.subr.bf16.mxu0 0
    %835 = vmatpush1.bf16.msra.mxu0 %v816
    %836 = vmatprep.subr.bf16.mxu0 0
    %837 = vmatpush1.bf16.msra.mxu0 %v817
    %838 = vmatprep.subr.bf16.mxu0 0
    %839 = vmatpush1.bf16.msra.mxu0 %v818
    %840 = vmatprep.subr.bf16.mxu0 0
    %841 = vmatpush1.bf16.msra.mxu0 %v819
    %842 = vmatprep.subr.bf16.mxu0 0
    %843 = vmatpush1.bf16.msra.mxu0 %v820
    %844 = vmatprep.subr.bf16.mxu0 0
    %845 = vmatpush1.bf16.msra.mxu0 %v821
    %846 = vmatprep.subr.bf16.mxu0 0
    %847 = vmatpush1.bf16.msra.mxu0 0
    %848 = vmatprep.subr.bf16.mxu0 0
    %849 = vmatpush1.bf16.msra.mxu0 0
    %850 = vmatprep.subr.bf16.mxu0 0
    %851 = vmatpush1.bf16.msra.mxu0 0
    %852 = vmatprep.subr.bf16.mxu0 0
    %853 = vmatpush1.bf16.msra.mxu0 0
    %854 = vmatprep.subr.bf16.mxu0 0
    %855 = vmatpush1.bf16.msra.mxu0 0
    %856 = vmatprep.subr.bf16.mxu0 0
    %857 = vmatpush1.bf16.msra.mxu0 0
    %858 = vmatprep.subr.bf16.mxu0 0
    %859 = vmatpush1.bf16.msra.mxu0 0
    %860 = vmatprep.subr.bf16.mxu0 0
    %861 = vmatpush1.bf16.msra.mxu0 0
    %862 = vmatprep.mubr.bf16.mxu0 0
    %863 = vmatmul.mubr.bf16.gmra.mrb[0].mxu0 %v758
    %v864 = vpop.f32.mrb[0].mxu0
    %v865 = vadd.f32 0.0, %v864
    %v866 = vpop.f32.mrb[0].mxu0
    %v867 = vpop.f32.mrb[0].mxu0
    %v868 = vadd.f32 0.0, %v867
    %v869 = vpop.f32.mrb[0].mxu0
    %870 = vmatprep.mubr.bf16.mxu0 0
    %871 = vmatmul.mubr.bf16.gmra.mrb[0].mxu0 %v766
    %v872 = vpop.f32.mrb[0].mxu0
    %v873 = vadd.f32 0.0, %v872
    %v874 = vpop.f32.mrb[0].mxu0
    %v875 = vpop.f32.mrb[0].mxu0
    %v876 = vadd.f32 0.0, %v875
    %v877 = vpop.f32.mrb[0].mxu0
    %878 = vmatprep.mubr.bf16.mxu0 0
    %879 = vmatmul.mubr.bf16.gmra.mrb[0].mxu0 %v774
    %v880 = vpop.f32.mrb[0].mxu0
    %v881 = vadd.f32 0.0, %v880
    %v882 = vpop.f32.mrb[0].mxu0
    %v883 = vpop.f32.mrb[0].mxu0
    %v884 = vadd.f32 0.0, %v883
    %v885 = vpop.f32.mrb[0].mxu0
    %886 = vmatprep.mubr.bf16.mxu0 0
    %887 = vmatmul.mubr.bf16.gmra.mrb[0].mxu0 %v777
    %v888 = vpop.f32.mrb[0].mxu0
    %v889 = vadd.f32 0.0, %v888
    %v890 = vpop.f32.mrb[0].mxu0
    %v891 = vpop.f32.mrb[0].mxu0
    %v892 = vadd.f32 0.0, %v891
    %v893 = vpop.f32.mrb[0].mxu0
    %894 = vdwg.mxu0
    %v911 = vunpack.c.l.b16 %v713
    %v912 = vunpack.c.l.b16 %v714
    %v913 = vunpack.c.l.b16 %v715
    %v914 = vunpack.c.l.b16 %v716
    %v915 = vunpack.c.l.b16 %v717
    %v916 = vunpack.c.l.b16 %v718
    %v917 = vunpack.c.l.b16 %v719
    %v918 = vunpack.c.l.b16 %v720
    %v919 = vunpack.c.l.b16 %v721
    %v920 = vunpack.c.l.b16 %v722
    %v921 = vunpack.c.l.b16 %v723
    %v922 = vunpack.c.l.b16 %v724
    %v923 = vunpack.c.l.b16 %v725
    %v924 = vunpack.c.l.b16 %v726
    %v925 = vunpack.c.l.b16 %v727
    %v926 = vunpack.c.l.b16 %v728
    %v927 = vpack.c.b16 %v912, %v911
    %v928 = vpack.c.b16 %v914, %v913
    %v929 = vpack.c.b16 %v916, %v915
    %v930 = vpack.c.b16 %v918, %v917
    %v931 = vpack.c.b16 %v920, %v919
    %v932 = vpack.c.b16 %v922, %v921
    %v933 = vpack.c.b16 %v924, %v923
    %v934 = vpack.c.b16 %v926, %v925
    %943 = vmatprep.subr.bf16.mxu0 0
    %944 = vmatpush1.bf16.msra.mxu0 %v927
    %945 = vmatprep.subr.bf16.mxu0 0
    %946 = vmatpush1.bf16.msra.mxu0 %v928
    %947 = vmatprep.subr.bf16.mxu0 0
    %948 = vmatpush1.bf16.msra.mxu0 %v929
    %949 = vmatprep.subr.bf16.mxu0 0
    %950 = vmatpush1.bf16.msra.mxu0 %v930
    %951 = vmatprep.subr.bf16.mxu0 0
    %952 = vmatpush1.bf16.msra.mxu0 %v931
    %953 = vmatprep.subr.bf16.mxu0 0
    %954 = vmatpush1.bf16.msra.mxu0 %v932
    %955 = vmatprep.subr.bf16.mxu0 0
    %956 = vmatpush1.bf16.msra.mxu0 %v933
    %957 = vmatprep.subr.bf16.mxu0 0
    %958 = vmatpush1.bf16.msra.mxu0 %v934
    %959 = vmatprep.subr.bf16.mxu0 0
    %960 = vmatpush1.bf16.msra.mxu0 0
    %961 = vmatprep.subr.bf16.mxu0 0
    %962 = vmatpush1.bf16.msra.mxu0 0
    %963 = vmatprep.subr.bf16.mxu0 0
    %964 = vmatpush1.bf16.msra.mxu0 0
    %965 = vmatprep.subr.bf16.mxu0 0
    %966 = vmatpush1.bf16.msra.mxu0 0
    %967 = vmatprep.subr.bf16.mxu0 0
    %968 = vmatpush1.bf16.msra.mxu0 0
    %969 = vmatprep.subr.bf16.mxu0 0
    %970 = vmatpush1.bf16.msra.mxu0 0
    %971 = vmatprep.subr.bf16.mxu0 0
    %972 = vmatpush1.bf16.msra.mxu0 0
    %973 = vmatprep.subr.bf16.mxu0 0
    %974 = vmatpush1.bf16.msra.mxu0 0
    %975 = vmatprep.mubr.bf16.mxu0 0
    %976 = vmatmul.mubr.bf16.gmra.mrb[0].mxu0 %v709
    %v977 = vpop.f32.mrb[0].mxu0
    %v978 = vadd.f32 %v865, %v977
    %v979 = vpop.f32.mrb[0].mxu0
    %v980 = vpop.f32.mrb[0].mxu0
    %v981 = vadd.f32 %v868, %v980
    %v982 = vpop.f32.mrb[0].mxu0
    %983 = vmatprep.mubr.bf16.mxu0 0
    %984 = vmatmul.mubr.bf16.gmra.mrb[0].mxu0 %v710
    %v985 = vpop.f32.mrb[0].mxu0
    %v986 = vadd.f32 %v873, %v985
    %v987 = vpop.f32.mrb[0].mxu0
    %v988 = vpop.f32.mrb[0].mxu0
    %v989 = vadd.f32 %v876, %v988
    %v990 = vpop.f32.mrb[0].mxu0
    %991 = vmatprep.mubr.bf16.mxu0 0
    %992 = vmatmul.mubr.bf16.gmra.mrb[0].mxu0 %v711
    %v993 = vpop.f32.mrb[0].mxu0
    %v994 = vadd.f32 %v881, %v993
    %v995 = vpop.f32.mrb[0].mxu0
    %v996 = vpop.f32.mrb[0].mxu0
    %v997 = vadd.f32 %v884, %v996
    %v998 = vpop.f32.mrb[0].mxu0
    %999 = vmatprep.mubr.bf16.mxu0 0
    %1000 = vmatmul.mubr.bf16.gmra.mrb[0].mxu0 %v712
    %v1001 = vpop.f32.mrb[0].mxu0
    %v1002 = vadd.f32 %v889, %v1001
    %v1003 = vpop.f32.mrb[0].mxu0
    %v1004 = vpop.f32.mrb[0].mxu0
    %v1005 = vadd.f32 %v892, %v1004
    %v1006 = vpop.f32.mrb[0].mxu0
    %1007 = vdwg.mxu0
    %v1008 = vld [vmem:[#allocation2] sm:$0xfe]
    %s1009 = scalar_lea.vmem [#allocation8], 128
    %v1010 = vld [vmem:[%s1009] sm:$0xf]
    %v1011 = vld [vmem:[%s1009 + $0x4] sm:$0xf]
    %v1012 = vld [vmem:[%s1009 + $0x8] sm:$0xf]
    %v1013 = vld [vmem:[%s1009 + $0xc] sm:$0xf]
    %v1014 = vld [vmem:[%s1009 + $0x10] sm:$0xf]
    %v1015 = vld [vmem:[%s1009 + $0x14] sm:$0xf]
    %v1016 = vld [vmem:[%s1009 + $0x18] sm:$0xf]
    %v1017 = vld [vmem:[%s1009 + $0x1c] sm:$0xf]
    %v1018 = vld [vmem:[%s1009 + $0x20] sm:$0xf]
    %v1019 = vld [vmem:[%s1009 + $0x24] sm:$0xf]
    %v1020 = vld [vmem:[%s1009 + $0x28] sm:$0xf]
    %v1021 = vld [vmem:[%s1009 + $0x2c] sm:$0xf]
    %v1022 = vld [vmem:[%s1009 + $0x30] sm:$0xf]
    %v1023 = vld [vmem:[%s1009 + $0x34] sm:$0xf]
    %v1024 = vld [vmem:[%s1009 + $0x38] sm:$0xf]
    %v1025 = vld [vmem:[%s1009 + $0x3c] sm:$0xf]
    %v1030 = vrot.slane %v1008, 1
    %v1031 = vrot.slane %v710, 1
    %v1032 = vsel %vm354, %v1030, %v1031
    %v1033 = vrot.slane %v711, 1
    %v1034 = vsel %vm354, %v1031, %v1033
    %v1035 = vrot.slane %v729, 1
    %v1036 = vsel %vm354, %v1033, %v1035
    %v1057 = vunpack.c.l.b16 %v1010
    %v1058 = vunpack.c.l.b16 %v1011
    %v1059 = vunpack.c.l.b16 %v1012
    %v1060 = vunpack.c.l.b16 %v1013
    %v1061 = vunpack.c.l.b16 %v1014
    %v1062 = vunpack.c.l.b16 %v1015
    %v1063 = vunpack.c.l.b16 %v1016
    %v1064 = vunpack.c.l.b16 %v1017
    %v1065 = vunpack.c.l.b16 %v1018
    %v1066 = vunpack.c.l.b16 %v1019
    %v1067 = vunpack.c.l.b16 %v1020
    %v1068 = vunpack.c.l.b16 %v1021
    %v1069 = vunpack.c.l.b16 %v1022
    %v1070 = vunpack.c.l.b16 %v1023
    %v1071 = vunpack.c.l.b16 %v1024
    %v1072 = vunpack.c.l.b16 %v1025
    %v1073 = vpack.c.b16 %v1058, %v1057
    %v1074 = vpack.c.b16 %v1060, %v1059
    %v1075 = vpack.c.b16 %v1062, %v1061
    %v1076 = vpack.c.b16 %v1064, %v1063
    %v1077 = vpack.c.b16 %v1066, %v1065
    %v1078 = vpack.c.b16 %v1068, %v1067
    %v1079 = vpack.c.b16 %v1070, %v1069
    %v1080 = vpack.c.b16 %v1072, %v1071
    %1089 = vmatprep.subr.bf16.mxu0 0
    %1090 = vmatpush1.bf16.msra.mxu0 %v1073
    %1091 = vmatprep.subr.bf16.mxu0 0
    %1092 = vmatpush1.bf16.msra.mxu0 %v1074
    %1093 = vmatprep.subr.bf16.mxu0 0
    %1094 = vmatpush1.bf16.msra.mxu0 %v1075
    %1095 = vmatprep.subr.bf16.mxu0 0
    %1096 = vmatpush1.bf16.msra.mxu0 %v1076
    %1097 = vmatprep.subr.bf16.mxu0 0
    %1098 = vmatpush1.bf16.msra.mxu0 %v1077
    %1099 = vmatprep.subr.bf16.mxu0 0
    %1100 = vmatpush1.bf16.msra.mxu0 %v1078
    %1101 = vmatprep.subr.bf16.mxu0 0
    %1102 = vmatpush1.bf16.msra.mxu0 %v1079
    %1103 = vmatprep.subr.bf16.mxu0 0
    %1104 = vmatpush1.bf16.msra.mxu0 %v1080
    %1105 = vmatprep.subr.bf16.mxu0 0
    %1106 = vmatpush1.bf16.msra.mxu0 0
    %1107 = vmatprep.subr.bf16.mxu0 0
    %1108 = vmatpush1.bf16.msra.mxu0 0
    %1109 = vmatprep.subr.bf16.mxu0 0
    %1110 = vmatpush1.bf16.msra.mxu0 0
    %1111 = vmatprep.subr.bf16.mxu0 0
    %1112 = vmatpush1.bf16.msra.mxu0 0
    %1113 = vmatprep.subr.bf16.mxu0 0
    %1114 = vmatpush1.bf16.msra.mxu0 0
    %1115 = vmatprep.subr.bf16.mxu0 0
    %1116 = vmatpush1.bf16.msra.mxu0 0
    %1117 = vmatprep.subr.bf16.mxu0 0
    %1118 = vmatpush1.bf16.msra.mxu0 0
    %1119 = vmatprep.subr.bf16.mxu0 0
    %1120 = vmatpush1.bf16.msra.mxu0 0
    %1121 = vmatprep.mubr.bf16.mxu0 0
    %1122 = vmatmul.mubr.bf16.gmra.mrb[0].mxu0 %v1032
    %v1123 = vpop.f32.mrb[0].mxu0
    %v1124 = vadd.f32 0.0, %v1123
    %v1125 = vpop.f32.mrb[0].mxu0
    %v1126 = vpop.f32.mrb[0].mxu0
    %v1127 = vadd.f32 0.0, %v1126
    %v1128 = vpop.f32.mrb[0].mxu0
    %1129 = vmatprep.mubr.bf16.mxu0 0
    %1130 = vmatmul.mubr.bf16.gmra.mrb[0].mxu0 %v1034
    %v1131 = vpop.f32.mrb[0].mxu0
    %v1132 = vadd.f32 0.0, %v1131
    %v1133 = vpop.f32.mrb[0].mxu0
    %v1134 = vpop.f32.mrb[0].mxu0
    %v1135 = vadd.f32 0.0, %v1134
    %v1136 = vpop.f32.mrb[0].mxu0
    %1137 = vmatprep.mubr.bf16.mxu0 0
    %1138 = vmatmul.mubr.bf16.gmra.mrb[0].mxu0 %v1036
    %v1139 = vpop.f32.mrb[0].mxu0
    %v1140 = vadd.f32 0.0, %v1139
    %v1141 = vpop.f32.mrb[0].mxu0
    %v1142 = vpop.f32.mrb[0].mxu0
    %v1143 = vadd.f32 0.0, %v1142
    %v1144 = vpop.f32.mrb[0].mxu0
    %1145 = vmatprep.mubr.bf16.mxu0 0
    %1146 = vmatmul.mubr.bf16.gmra.mrb[0].mxu0 %v1035
    %v1147 = vpop.f32.mrb[0].mxu0
    %v1148 = vadd.f32 0.0, %v1147
    %v1149 = vpop.f32.mrb[0].mxu0
    %v1150 = vpop.f32.mrb[0].mxu0
    %v1151 = vadd.f32 0.0, %v1150
    %v1152 = vpop.f32.mrb[0].mxu0
    %1153 = vdwg.mxu0
    %v1154 = vadd.f32 %v978, %v1124
    %v1155 = vadd.f32 %v981, %v1127
    %v1156 = vadd.f32 %v986, %v1132
    %v1157 = vadd.f32 %v989, %v1135
    %v1158 = vadd.f32 %v994, %v1140
    %v1159 = vadd.f32 %v997, %v1143
    %v1160 = vadd.f32 %v1002, %v1148
    %v1161 = vadd.f32 %v1005, %v1151
    %v1162 = vld [vmem:[%s5] sm:$0x1]
    %v1164 = vlaneseq
    %v1165 = vshrl.u32 %v1164, 7
    %v1166 = vsub.s32 0, %v1165
    %v1167 = vrot.slane %v1162, %v1166
    %v1169 = vmul.f32 %v1154, %v1167
    %v1170 = vmul.f32 %v1155, %v1167
    %v1171 = vmul.f32 %v1156, %v1167
    %v1172 = vmul.f32 %v1157, %v1167
    %v1173 = vmul.f32 %v1158, %v1167
    %v1174 = vmul.f32 %v1159, %v1167
    %v1175 = vmul.f32 %v1160, %v1167
    %v1176 = vmul.f32 %v1161, %v1167
    %v1177 = vld [vmem:[%s6] sm:$0x1]
    %v1179 = vlaneseq
    %v1180 = vshrl.u32 %v1179, 7
    %v1181 = vsub.s32 0, %v1180
    %v1182 = vrot.slane %v1177, %v1181
    %v1184 = vadd.f32 %v1169, %v1182
    %v1185 = vadd.f32 %v1170, %v1182
    %v1186 = vadd.f32 %v1171, %v1182
    %v1187 = vadd.f32 %v1172, %v1182
    %v1188 = vadd.f32 %v1173, %v1182
    %v1189 = vadd.f32 %v1174, %v1182
    %v1190 = vadd.f32 %v1175, %v1182
    %v1191 = vadd.f32 %v1176, %v1182
    %v1192 = vmax.f32 %v1184, 0.0
    %v1193 = vmax.f32 %v1185, 0.0
    %v1194 = vmax.f32 %v1186, 0.0
    %v1195 = vmax.f32 %v1187, 0.0
    %v1196 = vmax.f32 %v1188, 0.0
    %v1197 = vmax.f32 %v1189, 0.0
    %v1198 = vmax.f32 %v1190, 0.0
    %v1199 = vmax.f32 %v1191, 0.0
    %1200 = vst [vmem:[#allocation9] sm:$0xff] %v1192
    %1201 = vst [vmem:[#allocation9 + $0x8] sm:$0xff] %v1193
    %1202 = vst [vmem:[#allocation9 + $0x10] sm:$0xff] %v1194
    %1203 = vst [vmem:[#allocation9 + $0x18] sm:$0xff] %v1195
    %1204 = vst [vmem:[#allocation9 + $0x20] sm:$0xff] %v1196
    %1205 = vst [vmem:[#allocation9 + $0x28] sm:$0xff] %v1197
    %1206 = vst [vmem:[#allocation9 + $0x30] sm:$0xff] %v1198
    %1207 = vst [vmem:[#allocation9 + $0x38] sm:$0x3f] %v1199
    %1208 = vst [vmem:[#allocation9 + $0x3e] sm:$0x3] 0.0
    // Predicated region
    $region42: #{tpu_custom_call.1} parent=1 // pred_check
      _
    $region43: #{tpu_custom_call.1} parent=1 // pred_check_branch
      %1210 = sbr.rel (0) target = $region45
    $region44: #{tpu_custom_call.1} parent=1 // pred_region
      %s1212 = ssub.s32 1024, 1024
      %1213 = vsyncadd [#allocation5], %s1212
      %s1214 = sshll.u32 [#allocation9], 4
      %s1215 = int_to_ptr.vmem [resolvable:$true] %s1214
      %1220 = dma.vmem_to_hbm [thread:$0]  %s1215, 1024, %s7, [#allocation5], 128, 128, 8
    $region45: #{tpu_custom_call.1} parent=1 // pred_fallthru
      _
    // Predicated region
    $region46: #{tpu_custom_call.1} parent=1 // pred_check
      _
    $region47: #{tpu_custom_call.1} parent=1 // pred_check_branch
      %1222 = sbr.rel (0) target = $region49
    $region48: #{tpu_custom_call.1} parent=1 // pred_region
      %1223 = dma.done [#allocation5], 1024
    $region49: #{tpu_custom_call.1} parent=1 // pred_fallthru
      _
    %1224 = vsyncpa [#allocation4], 1
    %1225 = vsyncpa [#allocation7], 1
    %1226 = vsyncpa [#allocation5], 1

</llo_original>
